<compile_context>
chip_gen: v7x
topology: tpu7x:2x2x1
jax: 0.10.0
libtpu: 0.0.40
codegen_flags: <defaults>
</compile_context>

<pallas_src>
import functools
import numpy as np
import jax
import jax.numpy as jnp
from jax.experimental import pallas as pl
from jax.experimental.pallas import tpu as pltpu


# ---------------------------------------------------------------------------
# helpers
# ---------------------------------------------------------------------------

def _round_up(n, m):
    return -(-int(n) // int(m)) * int(m)


def _tile(n, unit, target):
    """Pick (tile, padded_n): tile is a multiple of `unit`, padded_n % tile == 0."""
    n_pad = _round_up(max(int(n), 1), unit)
    t = min(n_pad, int(target))
    n_pad = _round_up(n_pad, t)
    return int(t), int(n_pad)


def _row_target(lane_width, budget_bytes=2 << 20):
    """Row-tile target so one (rows, lane_width) f32 block stays ~<= budget."""
    r = budget_bytes // (4 * max(int(lane_width), 1))
    r = max(8, (r // 8) * 8)
    return int(min(256, r))


def _cparams(n_axes):
    return pltpu.CompilerParams(
        dimension_semantics=("parallel",) * n_axes,
        vmem_limit_bytes=32 * 1024 * 1024)


def _fir_taps(fir_kernel):
    k = np.asarray(fir_kernel, np.float32)
    k = k / k.sum()                  # _setup_kernel, gain = 1
    kflip = k[::-1]                  # torch.flip before F.conv1d (true convolution)
    return tuple(float(v) for v in kflip)


# ---------------------------------------------------------------------------
# Pallas kernels
# ---------------------------------------------------------------------------

def _avg_pool_kernel(xe_ref, xo_ref, o_ref):
    # out[r, t] = (x[r, 2t] + x[r, 2t+1]) / 2   (phases pre-split in wrapper)
    o_ref[...] = ((xe_ref[...] + xo_ref[...]) * 0.5).astype(o_ref.dtype)


def _fir_down2_kernel(xe_ref, xo_ref, o_ref, *, taps, t_out):
    # depthwise 4-tap FIR (flipped taps) + stride-2 downsample via shifted adds:
    # out[r, t] = c0*xp[2t] + c1*xp[2t+1] + c2*xp[2t+2] + c3*xp[2t+3]
    c0, c1, c2, c3 = taps
    xe = xe_ref[...]                          # (Rt, t_out + 1) even phase of padded x
    xo = xo_ref[...]                          # (Rt, t_out + 1) odd  phase
    o_ref[...] = (c0 * xe[:, 0:t_out] + c1 * xo[:, 0:t_out]
                  + c2 * xe[:, 1:t_out + 1] + c3 * xo[:, 1:t_out + 1]
                  ).astype(o_ref.dtype)


def _conv3_stride2_kernel(x_ref, w_ref, b_ref, o_ref):
    # single fused matmul: (O, 3C) @ (3C, Tt)  == K=3, stride-2 conv tile
    y = jnp.dot(w_ref[...], x_ref[0], preferred_element_type=jnp.float32)
    o_ref[0] = (y + b_ref[...]).astype(o_ref.dtype)


def _conv_down_fir_kernel(x_ref, h_ref, w_ref, b_ref, o_ref, *, taps, tt):
    # stage 1: (O, 3C) @ (3C, tt) main matmul plus a 128-lane look-ahead "halo"
    #          matmul (the same rhs array, one 128-block ahead).  rhs had one
    #          zero column prepended, so y[:, m] == zero-left-padded conv out.
    # stage 2: 4-tap FIR as shifted lane slices of y (no Toeplitz matmul).
    c0, c1, c2, c3 = taps
    w = w_ref[...]
    y_main = jnp.dot(w, x_ref[0], preferred_element_type=jnp.float32)   # (O, tt)
    y_halo = jnp.dot(w, h_ref[0], preferred_element_type=jnp.float32)   # (O, 128)
    y = jnp.concatenate([y_main, y_halo], axis=-1)                      # (O, tt+128)
    out = (c0 * y[:, 0:tt] + c1 * y[:, 1:tt + 1]
           + c2 * y[:, 2:tt + 2] + c3 * y[:, 3:tt + 3]) + b_ref[...]
    o_ref[0] = out.astype(o_ref.dtype)


# ---------------------------------------------------------------------------
# jitted path implementations (wrapper ops fuse; pallas_call does the work)
# ---------------------------------------------------------------------------

@jax.jit
def _avg_pool_impl(x):
    B, C, L = x.shape
    T = L // 2
    R = B * C
    xr = x.reshape(R, L)
    # TODO(synk): fuse the stride-2 phase split into the kernel input DMA
    # (in-kernel strided ref loads) to drop one HBM pass.
    xe = xr[:, 0:2 * T:2]
    xo = xr[:, 1:2 * T:2]
    tt, t_pad = _tile(T, 128, 512)
    rt, r_pad = _tile(R, 8, 256)
    xe = jnp.pad(xe, ((0, r_pad - R), (0, t_pad - T)))
    xo = jnp.pad(xo, ((0, r_pad - R), (0, t_pad - T)))
    out = pl.pallas_call(
        _avg_pool_kernel,
        grid=(r_pad // rt, t_pad // tt),
        in_specs=[pl.BlockSpec((rt, tt), lambda i, j: (i, j)),
                  pl.BlockSpec((rt, tt), lambda i, j: (i, j))],
        out_specs=pl.BlockSpec((rt, tt), lambda i, j: (i, j)),
        out_shape=jax.ShapeDtypeStruct((r_pad, t_pad), x.dtype),
        compiler_params=_cparams(2),
    )(xe, xo)
    return out[:R, :T].reshape(B, C, T)


@functools.partial(jax.jit, static_argnames=("taps",))
def _fir_downsample_impl(x, *, taps):
    B, C, L = x.shape
    R = B * C
    T = L // 2                               # ceil((L + 2 - 4 + 1) / 2)
    xp = jnp.pad(x, ((0, 0), (0, 0), (1, 1))).reshape(R, L + 2)
    xpe = xp[:, 0::2][:, :T + 1]
    xpo = xp[:, 1::2][:, :T + 1]
    t_pad = _round_up(max(T, 1), 128)        # lane-dense output
    rt, r_pad = _tile(R, 8, _row_target(t_pad + 1))
    xpe = jnp.pad(xpe, ((0, r_pad - R), (0, t_pad - T)))
    xpo = jnp.pad(xpo, ((0, r_pad - R), (0, t_pad - T)))
    kern = functools.partial(_fir_down2_kernel, taps=taps, t_out=t_pad)
    out = pl.pallas_call(
        kern,
        grid=(r_pad // rt,),
        in_specs=[pl.BlockSpec((rt, t_pad + 1), lambda i: (i, 0)),
                  pl.BlockSpec((rt, t_pad + 1), lambda i: (i, 0))],
        out_specs=pl.BlockSpec((rt, t_pad), lambda i: (i, 0)),
        out_shape=jax.ShapeDtypeStruct((r_pad, t_pad), x.dtype),
        compiler_params=_cparams(1),
    )(xpe, xpo)
    return out[:R, :T].reshape(B, C, T)


@jax.jit
def _conv_stride2_impl(x, weight, bias):
    B, C, L = x.shape
    O = weight.shape[0]
    xp = jnp.pad(x, ((0, 0), (0, 0), (1, 0)))
    T = (xp.shape[-1] - 3) // 2 + 1
    xpe = xp[:, :, 0::2]
    xpo = xp[:, :, 1::2]
    # im2col for K=3, stride-2: rhs[b, k*C + c, t] = xp[b, c, 2t + k]
    rhs = jnp.concatenate([xpe[:, :, 0:T], xpo[:, :, 0:T], xpe[:, :, 1:T + 1]],
                          axis=1)                              # (B, 3C, T)
    tt, t_pad = _tile(T, 128, 512)
    rhs = jnp.pad(rhs, ((0, 0), (0, 0), (0, t_pad - T)))
    w2 = jnp.transpose(weight, (0, 2, 1)).reshape(O, 3 * C)    # (O, 3C)
    b2 = bias.reshape(O, 1)
    out = pl.pallas_call(
        _conv3_stride2_kernel,
        grid=(B, t_pad // tt),
        in_specs=[pl.BlockSpec((1, 3 * C, tt), lambda b, j: (b, 0, j)),
                  pl.BlockSpec((O, 3 * C), lambda b, j: (0, 0)),
                  pl.BlockSpec((O, 1), lambda b, j: (0, 0))],
        out_specs=pl.BlockSpec((1, O, tt), lambda b, j: (b, 0, j)),
        out_shape=jax.ShapeDtypeStruct((B, O, t_pad), x.dtype),
        compiler_params=_cparams(2),
    )(rhs, w2, b2)
    return out[:, :, :T]


@functools.partial(jax.jit, static_argnames=("taps",))
def _conv_down_fir_impl(x, weight, bias, *, taps):
    B, C, L = x.shape
    O = weight.shape[0]
    Tc = (L - 3) // 2 + 1                    # stride-2, K=3, no padding
    J = Tc - 1                               # after zero-padded 4-tap FIR
    tt, j_pad = _tile(J, 128, 512)           # lane-dense output tiles
    n_j = j_pad // tt
    w_lanes = j_pad + tt                     # divisible by tt & 128; >= 1 + Tc
    xe = x[:, :, 0::2]
    xo = x[:, :, 1::2]
    rhs = jnp.concatenate([xe[:, :, 0:Tc], xo[:, :, 0:Tc], xe[:, :, 1:Tc + 1]],
                          axis=1)                              # (B, 3C, Tc)
    # One zero column prepended -> matmul output is already the zero-left-
    # padded conv result; the FIR is then pure shifted lane slices in-kernel.
    rhs = jnp.pad(rhs, ((0, 0), (0, 0), (1, w_lanes - 1 - Tc)))
    w2 = jnp.transpose(weight, (0, 2, 1)).reshape(O, 3 * C)
    b2 = bias.reshape(O, 1)
    kern = functools.partial(_conv_down_fir_kernel, taps=taps, tt=tt)
    hb = tt // 128                            # halo block stride (in 128-lane blocks)
    out = pl.pallas_call(
        kern,
        grid=(B, n_j),
        in_specs=[pl.BlockSpec((1, 3 * C, tt), lambda b, j: (b, 0, j)),
                  # same rhs, one 128-lane block past the main tile (FIR halo)
                  pl.BlockSpec((1, 3 * C, 128), lambda b, j: (b, 0, (j + 1) * hb)),
                  pl.BlockSpec((O, 3 * C), lambda b, j: (0, 0)),
                  pl.BlockSpec((O, 1), lambda b, j: (0, 0))],
        out_specs=pl.BlockSpec((1, O, tt), lambda b, j: (b, 0, j)),
        out_shape=jax.ShapeDtypeStruct((B, O, j_pad), x.dtype),
        compiler_params=_cparams(2),
    )(rhs, rhs, w2, b2)
    return out[:, :, :J]


# ---------------------------------------------------------------------------
# Downsample module (JAX/Pallas port)
# ---------------------------------------------------------------------------

class Downsample:
    def __init__(self, in_ch=None, out_ch=None, with_conv=False, fir=False,
                 fir_kernel=(1, 3, 3, 1), key=None):
        out_ch = out_ch if out_ch else in_ch
        self.fir = fir
        self.with_conv = with_conv
        self.fir_kernel = fir_kernel
        self.out_ch = out_ch
        self.weight = None
        self.bias = None
        if with_conv:
            if key is None:
                key = jax.random.PRNGKey(0)
            shape = (out_ch, in_ch, 3)
            # default_initializer(): variance_scaling(1.0, 'fan_avg', 'uniform')
            fan_in, fan_out = in_ch * 3, out_ch * 3
            variance = 1.0 / ((fan_in + fan_out) / 2.0)
            self.weight = (jax.random.uniform(key, shape, jnp.float32, -1.0, 1.0)
                           * np.sqrt(3.0 * variance)).astype(jnp.float32)
            self.bias = jnp.zeros((out_ch,), jnp.float32)

    def __call__(self, x):
        if not self.fir:
            if self.with_conv:
                return _conv_stride2_impl(x, self.weight, self.bias)
            return _avg_pool_impl(x)
        taps = _fir_taps(self.fir_kernel)
        if not self.with_conv:
            return _fir_downsample_impl(x, taps=taps)
        return _conv_down_fir_impl(x, self.weight, self.bias, taps=taps)


# ---------------------------------------------------------------------------
# NumPy reference (for correctness check)
# ---------------------------------------------------------------------------

def _np_conv1d(x, w, stride=1, bias=None):
    B, C, L = x.shape
    O, _, K = w.shape
    T = (L - K) // stride + 1
    y = np.zeros((B, O, T), np.float32)
    for t in range(T):
        seg = x[:, :, t * stride:t * stride + K]
        y[:, :, t] = np.einsum('bck,ock->bo', seg, w)
    if bias is not None:
        y = y + bias.reshape(1, -1, 1)
    return y


def _np_upfirdn1d(x, k, down=1, pad=(0, 0)):
    xp = np.pad(x, ((0, 0), (0, 0), (pad[0], pad[1])))
    kf = k[::-1]
    lc = xp.shape[-1] - len(k) + 1
    y = np.zeros(xp.shape[:2] + (lc,), np.float32)
    for i in range(len(k)):
        y += kf[i] * xp[:, :, i:i + lc]
    if down > 1:
        y = y[:, :, ::down]
    return y


def _np_reference(x, mod):
    k = np.asarray(mod.fir_kernel, np.float32)
    k = k / k.sum()
    if not mod.fir:
        if mod.with_conv:
            xp = np.pad(x, ((0, 0), (0, 0), (1, 0)))
            return _np_conv1d(xp, np.asarray(mod.weight), stride=2,
                              bias=np.asarray(mod.bias))
        lout = x.shape[-1] // 2
        return 0.5 * (x[:, :, 0:2 * lout:2] + x[:, :, 1:2 * lout:2])
    if not mod.with_conv:
        return _np_upfirdn1d(x, k, down=2, pad=(1, 1))
    y = _np_conv1d(x, np.asarray(mod.weight), stride=2)
    y = _np_upfirdn1d(y, k, pad=(1, 1))
    return y + np.asarray(mod.bias).reshape(1, -1, 1)


# ---------------------------------------------------------------------------

if __name__ == "__main__":
    key = jax.random.PRNGKey(0)
    kx, kw = jax.random.split(key)
    B, C, L = 2, 4, 16
    out_ch = 4
    x = jax.random.normal(kx, (B, C, L), jnp.float32)
    x_np = np.asarray(x)

    configs = [
        dict(with_conv=False, fir=False),   # avg_pool1d(k=2, s=2)
        dict(with_conv=True,  fir=False),   # pad(1,0) + conv3(stride 2)
        dict(with_conv=False, fir=True),    # FIR (1,3,3,1)/8 downsample
        dict(with_conv=True,  fir=True),    # conv3(stride 2) + FIR + bias
    ]
    for cfg in configs:
        mod = Downsample(in_ch=C, out_ch=out_ch, key=kw, **cfg)
        y = jax.block_until_ready(mod(x))
        y_ref = _np_reference(x_np, mod)
        assert y.shape == y_ref.shape, (cfg, y.shape, y_ref.shape)
        assert np.allclose(np.asarray(y), y_ref, rtol=1e-4, atol=1e-4), cfg
    print("KERNEL_OK")
</pallas_src>

<mosaic_0001>
module attributes {stable_mosaic.version = 11 : i64} {
  func.func @_avg_pool_kernel(%arg0: i32, %arg1: i32, %arg2: memref<8x128xf32, #tpu.memory_space<vmem>>, %arg3: memref<8x128xf32, #tpu.memory_space<vmem>>, %arg4: memref<8x128xf32, #tpu.memory_space<vmem>>) attributes {dimension_semantics = [#tpu.dimension_semantics<parallel>, #tpu.dimension_semantics<parallel>], iteration_bounds = array<i64: 1, 1>, scalar_prefetch = 0 : i64, scratch_operands = 0 : i64, tpu.core_type = #tpu.core_type<tc>, window_params = [{transform_indices = @transform_0, window_bounds = array<i64: 8, 128>}, {transform_indices = @transform_1, window_bounds = array<i64: 8, 128>}, {transform_indices = @transform_2, window_bounds = array<i64: 8, 128>}]} {
    %c0 = arith.constant 0 : index
    %c0_0 = arith.constant 0 : index
    %0 = vector.load %arg2[%c0, %c0_0] : memref<8x128xf32, #tpu.memory_space<vmem>>, vector<8x128xf32>
    %c0_1 = arith.constant 0 : index
    %c0_2 = arith.constant 0 : index
    %1 = vector.load %arg3[%c0_1, %c0_2] : memref<8x128xf32, #tpu.memory_space<vmem>>, vector<8x128xf32>
    %2 = arith.addf %0, %1 : vector<8x128xf32>
    %cst = arith.constant 5.000000e-01 : f32
    %3 = vector.broadcast %cst : f32 to vector<8x128xf32>
    %4 = arith.mulf %2, %3 : vector<8x128xf32>
    %c0_3 = arith.constant 0 : index
    %c0_4 = arith.constant 0 : index
    %5 = vector.load %arg4[%c0_3, %c0_4] : memref<8x128xf32, #tpu.memory_space<vmem>>, vector<8x128xf32>
    tpu.vector_store %arg4[%c0_3, %c0_4], %4 {strides = array<i32>} : memref<8x128xf32, #tpu.memory_space<vmem>>, vector<8x128xf32>,
    return
  }
  func.func @transform_0(%arg0: i32, %arg1: i32) -> (i32, i32) {
    %c0_i32 = arith.constant 0 : i32
    return %arg0, %arg1 : i32, i32
  }
  func.func @transform_1(%arg0: i32, %arg1: i32) -> (i32, i32) {
    %c0_i32 = arith.constant 0 : i32
    return %arg0, %arg1 : i32, i32
  }
  func.func @transform_2(%arg0: i32, %arg1: i32) -> (i32, i32) {
    %c0_i32 = arith.constant 0 : i32
    return %arg0, %arg1 : i32, i32
  }
}

</mosaic_0001>

<llo_original>
// kernel: _avg_pool_impl.1
$region0: #{_avg_pool_impl.1}
  #allocation0 [shape = 'u32[]', space=smem, size = 0x4, offset = 0x4, fixed_abs, tag = 'smem constant byte address 0x4 - core index']
  #allocation1 [shape = 'u32[144,128]{1,0:T(1,128)}', space=vmem, size = 0x12000, scoped, tag = 'internal scratch']
  %s0 = inlined_call_operand.vmem [shape: f32[8,128], index: 0, kind: input, shape index: {}]
  %s1 = inlined_call_operand.vmem [shape: f32[8,128], index: 1, kind: input, shape index: {}]
  %s2 = inlined_call_operand.hbm [shape: f32[8,128], index: 2, kind: output, shape index: {}]
  %s3 = sld [smem:[#allocation0]]
  $region18: #{_avg_pool_impl.1} parent=0
    _
  %s5 = ssub.s32 1, %s3
  %s6 = scalar_select 0, %s5, %s3
  $region1: #{_avg_pool_impl.1} parent=0
    #allocation2 [shape = 'u8[4096]{0}', space=vmem, size = 0x1000, scoped, tag = 'output window, operand 0, single buffered']
    #allocation3 [shape = 's32[1]{0}', space=sflag, size = 0x4, scoped, tag = 'scoped memory for _avg_pool_impl.1']
    %7 = vsyncpa [#allocation3], 0
    // Predicated region
    $region2: #{_avg_pool_impl.1} parent=1 // pred_check
      _
    $region3: #{_avg_pool_impl.1} parent=1 // pred_check_branch
      %9 = sbr.rel (0) target = $region5
    $region4: #{_avg_pool_impl.1} parent=1 // pred_region
      _
    $region5: #{_avg_pool_impl.1} parent=1 // pred_fallthru
      _
    // Predicated region
    $region6: #{_avg_pool_impl.1} parent=1 // pred_check
      _
    $region7: #{_avg_pool_impl.1} parent=1 // pred_check_branch
      %11 = sbr.rel (0) target = $region9
    $region8: #{_avg_pool_impl.1} parent=1 // pred_region
      _
    $region9: #{_avg_pool_impl.1} parent=1 // pred_fallthru
      _
    %v12 = vld [vmem:[%s0] sm:$0xff]
    %v13 = vld [vmem:[%s1] sm:$0xff]
    %v14 = vadd.f32 %v12, %v13
    %v15 = vmul.f32 %v14, 0.5
    %16 = vst [vmem:[#allocation2] sm:$0xff] %v15
    // Predicated region
    $region10: #{_avg_pool_impl.1} parent=1 // pred_check
      _
    $region11: #{_avg_pool_impl.1} parent=1 // pred_check_branch
      %18 = sbr.rel (0) target = $region13
    $region12: #{_avg_pool_impl.1} parent=1 // pred_region
      %s20 = ssub.s32 128, 128
      %21 = vsyncadd [#allocation3], %s20
      %s23 = sshll.u32 [#allocation2], 4
      %s24 = int_to_ptr.vmem [resolvable:$true] %s23
      %26 = dma.vmem_to_hbm [thread:$0]  %s24, 128, %s2, [#allocation3]
    $region13: #{_avg_pool_impl.1} parent=1 // pred_fallthru
      _
    // Predicated region
    $region14: #{_avg_pool_impl.1} parent=1 // pred_check
      _
    $region15: #{_avg_pool_impl.1} parent=1 // pred_check_branch
      %28 = sbr.rel (0) target = $region17
    $region16: #{_avg_pool_impl.1} parent=1 // pred_region
      %29 = dma.done [#allocation3], 128
    $region17: #{_avg_pool_impl.1} parent=1 // pred_fallthru
      _
    %30 = vsyncpa [#allocation3], 1

</llo_original>
